<compile_context>
chip_gen: v5e
topology: v5e:2x2
jax: 0.10.0
libtpu: 0.0.40
codegen_flags: <defaults>
</compile_context>

<pallas_src>
import jax
import jax.numpy as jnp
from jax.experimental import pallas as pl
from jax.experimental.pallas import tpu as pltpu


def nmp_block_kernel(x_ref, mask_ref, wf_ref, bf_ref, wih_ref, bih_ref, o_ref):
    bt, n, dim = x_ref.shape
    cdt = wf_ref.dtype                           # MXU operand dtype (f32 or bf16)

    x3 = x_ref[...]                              # (Bt, n, dim) f32
    xf = x3.reshape(bt * n, dim)                 # fold batch into the MXU M dimension

    # --- one wide MXU matmul for everything that has LHS x: [msg | gh | s] ---
    fused = jnp.dot(xf.astype(cdt), wf_ref[...],
                    preferred_element_type=jnp.float32) + bf_ref[...]
    msg = jnp.maximum(fused[:, :dim], 0.0)                  # (Bt*n, dim)   message MLP
    gh = fused[:, dim:4 * dim]                              # (Bt*n, 3*dim) GRU hidden gates
    s = fused[:, 4 * dim:4 * dim + 3]                       # (Bt*n, 3)     spatial embedding

    # --- pairwise squared distances via the Gram trick (no (n, n, 3) expansion) ---
    s3 = s.reshape(bt, n, 3)
    gram = jnp.einsum("bni,bmi->bnm", s3, s3,
                      preferred_element_type=jnp.float32)   # (Bt, n, n)
    sq = jnp.sum(s3 * s3, axis=-1)                          # (Bt, n)
    dist = jnp.maximum(sq[:, :, None] + sq[:, None, :] - 2.0 * gram, 0.0)

    # --- adjacency (mask streamed as int8/bool/float, cast here) ---
    A = jnp.exp(-dist) * mask_ref[...].astype(jnp.float32)  # (Bt, n, n)

    # --- aggregate messages: batched (n, n) x (n, dim) on the MXU ---
    x_nmp = jnp.einsum("bnm,bmd->bnd", A.astype(cdt),
                       msg.reshape(bt, n, dim).astype(cdt),
                       preferred_element_type=jnp.float32)  # (Bt, n, dim)
    x_nmp = x_nmp.reshape(bt * n, dim)

    # --- GRU cell update (input = x_nmp, hidden = x), torch r/z/n gate order ---
    gi = jnp.dot(x_nmp.astype(cdt), wih_ref[...],
                 preferred_element_type=jnp.float32) + bih_ref[...]
    r = jax.nn.sigmoid(gi[:, 0 * dim:1 * dim] + gh[:, 0 * dim:1 * dim])
    z = jax.nn.sigmoid(gi[:, 1 * dim:2 * dim] + gh[:, 1 * dim:2 * dim])
    ng = jnp.tanh(gi[:, 2 * dim:3 * dim] + r * gh[:, 2 * dim:3 * dim])
    h = (1.0 - z) * ng + z * xf

    o_ref[...] = h.reshape(bt, n, dim).astype(o_ref.dtype)


def _choose_block_batch(bs, n, dim, *, budget_bytes=8 << 20):
    """Largest divisor of bs whose double-buffered streamed blocks fit a VMEM budget."""
    per_batch = 2 * (2 * n * dim * 4 + n * n)   # x + out (f32) + mask (int8), x2 buffers
    bt = max(1, min(bs, budget_bytes // max(per_batch, 1)))
    while bs % bt:
        bt -= 1
    return bt


def basic_nmp_block(x, mask, params, *, compute_dtype=None, block_batch=None):
    bs, n, dim = x.shape
    ws, b_s, wm, bm, wih, bih, whh, bhh = params

    # Fuse the three x-LHS weights into one wide MXU operand.
    # Column layout: [ W_m (dim) | W_hh (3*dim) | W_s (3) ]  -- gate-sized blocks stay at
    # multiples of dim (lane-aligned when dim % 128 == 0); the degenerate 3-wide spatial
    # embedding rides along instead of being its own N=3 matmul.
    wf = jnp.concatenate([wm, whh, ws], axis=1)             # (dim, 4*dim + 3)
    bf = jnp.concatenate([bm, bhh, b_s], axis=1)            # (1,   4*dim + 3)

    cdt = x.dtype if compute_dtype is None else jnp.dtype(compute_dtype)
    wf_c = wf.astype(cdt)
    wih_c = wih.astype(cdt)
    bf32 = bf.astype(jnp.float32)                           # biases added post-accumulation
    bih32 = bih.astype(jnp.float32)

    bt = _choose_block_batch(bs, n, dim) if block_batch is None else block_batch
    assert bs % bt == 0, f"block_batch={bt} must divide batch size {bs}"
    grid = (bs // bt,)

    # VMEM budget: streamed blocks (double-buffered) + resident weights.  Only raise the
    # scoped limit if we actually exceed the 32 MiB default; stay under v7x's 64 MiB/core.
    itemsize = jnp.dtype(x.dtype).itemsize
    w_itemsize = jnp.dtype(cdt).itemsize
    stream_bytes = 2 * bt * (2 * n * dim * itemsize + n * n * jnp.dtype(mask.dtype).itemsize)
    weight_bytes = 2 * (wf_c.size * w_itemsize + wih_c.size * w_itemsize
                        + bf32.size * 4 + bih32.size * 4)
    est = stream_bytes + weight_bytes + (4 << 20)
    vmem_limit = None if est <= (32 << 20) else int(min(est, 60 << 20))

    flops = int(bs * (2 * n * dim * (4 * dim + 3)       # fused x-side matmul
                      + 2 * n * n * 3                   # Gram matrix
                      + 2 * n * n * dim                 # A @ msg
                      + 2 * n * dim * 3 * dim))         # gi matmul
    transcendentals = int(bs * (n * n + 3 * n * dim))   # exp + sigmoid/tanh gates
    bytes_accessed = int(wf_c.size * w_itemsize + wih_c.size * w_itemsize
                         + bf32.size * 4 + bih32.size * 4
                         + 2 * x.size * itemsize
                         + mask.size * jnp.dtype(mask.dtype).itemsize)

    const2d = lambda arr: pl.BlockSpec(arr.shape, lambda b: (0, 0))

    return pl.pallas_call(
        nmp_block_kernel,
        out_shape=jax.ShapeDtypeStruct((bs, n, dim), x.dtype),
        grid_spec=pltpu.PrefetchScalarGridSpec(
            num_scalar_prefetch=0,
            grid=grid,
            in_specs=[
                pl.BlockSpec((bt, n, dim), lambda b: (b, 0, 0)),   # x
                pl.BlockSpec((bt, n, n), lambda b: (b, 0, 0)),     # mask (int8 recommended)
                const2d(wf_c),    # [W_m | W_hh | W_s]   (dim, 4*dim+3)
                const2d(bf32),    # fused bias           (1,   4*dim+3)
                const2d(wih_c),   # W_ih                 (dim, 3*dim)
                const2d(bih32),   # b_ih                 (1,   3*dim)
            ],
            out_specs=pl.BlockSpec((bt, n, dim), lambda b: (b, 0, 0)),
        ),
        compiler_params=pltpu.CompilerParams(
            dimension_semantics=("parallel",),
            vmem_limit_bytes=vmem_limit),
        cost_estimate=pl.CostEstimate(flops=flops,
                                      transcendentals=transcendentals,
                                      bytes_accessed=bytes_accessed),
    )(x, mask, wf_c, bf32, wih_c, bih32)


def reference_jax(x, mask, params):
    """Pure-JAX reference for correctness checking (mirrors the PyTorch forward)."""
    ws, b_s, wm, bm, wih, bih, whh, bhh = params
    dim = x.shape[-1]
    s = x @ ws + b_s
    diff = s[:, :, None, :] - s[:, None, :, :]
    dist = jnp.sum(diff * diff, axis=-1)
    A = jnp.exp(-dist) * mask
    msg = jax.nn.relu(x @ wm + bm)
    x_nmp = jnp.einsum("bnm,bmd->bnd", A, msg)
    gi = x_nmp @ wih + bih
    gh = x @ whh + bhh
    r = jax.nn.sigmoid(gi[..., :dim] + gh[..., :dim])
    z = jax.nn.sigmoid(gi[..., dim:2 * dim] + gh[..., dim:2 * dim])
    n_gate = jnp.tanh(gi[..., 2 * dim:] + r * gh[..., 2 * dim:])
    return (1.0 - z) * n_gate + z * x


def init_params(key, dim):
    ks = jax.random.split(key, 8)
    scale = 0.1
    ws = scale * jax.random.normal(ks[0], (dim, 3), jnp.float32)
    b_s = scale * jax.random.normal(ks[1], (1, 3), jnp.float32)
    wm = scale * jax.random.normal(ks[2], (dim, dim), jnp.float32)
    bm = scale * jax.random.normal(ks[3], (1, dim), jnp.float32)
    wih = scale * jax.random.normal(ks[4], (dim, 3 * dim), jnp.float32)
    bih = scale * jax.random.normal(ks[5], (1, 3 * dim), jnp.float32)
    whh = scale * jax.random.normal(ks[6], (dim, 3 * dim), jnp.float32)
    bhh = scale * jax.random.normal(ks[7], (1, 3 * dim), jnp.float32)
    return ws, b_s, wm, bm, wih, bih, whh, bhh


if __name__ == "__main__":
    key = jax.random.PRNGKey(0)
    k_x, k_m, k_p = jax.random.split(key, 3)

    bs, n, dim = 2, 8, 32
    x = jax.random.normal(k_x, (bs, n, dim), jnp.float32)
    mask_bool = jax.random.uniform(k_m, (bs, n, n)) > 0.3
    mask_f32 = mask_bool.astype(jnp.float32)     # reference uses the float mask
    mask_i8 = mask_bool.astype(jnp.int8)         # kernel streams 4x fewer mask bytes
    params = init_params(k_p, dim)

    ref = reference_jax(x, mask_f32, params)

    # f32 compute path: bit-for-bit semantics of the module.
    out = basic_nmp_block(x, mask_i8, params)
    out = jax.block_until_ready(out)
    assert out.shape == (bs, n, dim)
    assert jnp.max(jnp.abs(out - ref)) < 1e-4, "mismatch vs pure-JAX reference (f32)"

    # bf16 MXU-operand path (accumulation + activations stay f32): looser tolerance.
    out_bf16 = basic_nmp_block(x, mask_i8, params, compute_dtype=jnp.bfloat16)
    out_bf16 = jax.block_until_ready(out_bf16)
    assert jnp.max(jnp.abs(out_bf16 - ref)) < 1e-1, "mismatch vs reference (bf16 MXU path)"

    print("KERNEL_OK")
</pallas_src>

<mosaic_0001>
module attributes {stable_mosaic.version = 11 : i64} {
  func.func @nmp_block_kernel(%arg0: i32, %arg1: memref<2x8x32xf32, #tpu.memory_space<vmem>>, %arg2: memref<2x8x8xi8, #tpu.memory_space<vmem>>, %arg3: memref<32x131xf32, #tpu.memory_space<vmem>>, %arg4: memref<1x131xf32, #tpu.memory_space<vmem>>, %arg5: memref<32x96xf32, #tpu.memory_space<vmem>>, %arg6: memref<1x96xf32, #tpu.memory_space<vmem>>, %arg7: memref<2x8x32xf32, #tpu.memory_space<vmem>>) attributes {dimension_semantics = [#tpu.dimension_semantics<parallel>], iteration_bounds = array<i64: 1>, scalar_prefetch = 0 : i64, scratch_operands = 0 : i64, tpu.core_type = #tpu.core_type<tc>, window_params = [{transform_indices = @transform_0, window_bounds = array<i64: 2, 8, 32>}, {transform_indices = @transform_1, window_bounds = array<i64: 2, 8, 8>}, {pipeline_mode = #tpu.pipeline_mode<synchronous>, transform_indices = @transform_2, window_bounds = array<i64: 32, 131>}, {pipeline_mode = #tpu.pipeline_mode<synchronous>, transform_indices = @transform_3, window_bounds = array<i64: 1, 131>}, {pipeline_mode = #tpu.pipeline_mode<synchronous>, transform_indices = @transform_4, window_bounds = array<i64: 32, 96>}, {pipeline_mode = #tpu.pipeline_mode<synchronous>, transform_indices = @transform_5, window_bounds = array<i64: 1, 96>}, {transform_indices = @transform_6, window_bounds = array<i64: 2, 8, 32>}]} {
    %c0 = arith.constant 0 : index
    %c0_0 = arith.constant 0 : index
    %c0_1 = arith.constant 0 : index
    %0 = vector.load %arg1[%c0, %c0_0, %c0_1] : memref<2x8x32xf32, #tpu.memory_space<vmem>>, vector<2x8x32xf32>
    %1 = vector.shape_cast %0 : vector<2x8x32xf32> to vector<16x32xf32>
    %c0_2 = arith.constant 0 : index
    %c0_3 = arith.constant 0 : index
    %2 = vector.load %arg3[%c0_2, %c0_3] : memref<32x131xf32, #tpu.memory_space<vmem>>, vector<32x131xf32>
    %cst = arith.constant dense<0.000000e+00> : vector<16x131xf32>
    %3 = tpu.matmul %1, %2, %cst {dimension_numbers = #tpu.dot_dimension_numbers<[1], [0], [0], [1], [0, 0, 1, 1], [], []>} : vector<16x32xf32>, vector<32x131xf32>, vector<16x131xf32> -> vector<16x131xf32>
    %c0_4 = arith.constant 0 : index
    %c0_5 = arith.constant 0 : index
    %4 = vector.load %arg4[%c0_4, %c0_5] : memref<1x131xf32, #tpu.memory_space<vmem>>, vector<1x131xf32>
    %5 = vector.broadcast %4 : vector<1x131xf32> to vector<16x131xf32>
    %6 = arith.addf %3, %5 : vector<16x131xf32>
    %7 = vector.extract_strided_slice %6 {offsets = [0, 0], sizes = [16, 32], strides = [1, 1]} : vector<16x131xf32> to vector<16x32xf32>
    %cst_6 = arith.constant 0.000000e+00 : f32
    %8 = vector.broadcast %cst_6 : f32 to vector<16x32xf32>
    %9 = arith.maximumf %7, %8 : vector<16x32xf32>
    %10 = vector.extract_strided_slice %6 {offsets = [0, 32], sizes = [16, 96], strides = [1, 1]} : vector<16x131xf32> to vector<16x96xf32>
    %11 = vector.extract_strided_slice %6 {offsets = [0, 128], sizes = [16, 3], strides = [1, 1]} : vector<16x131xf32> to vector<16x3xf32>
    %12 = vector.shape_cast %11 : vector<16x3xf32> to vector<2x8x3xf32>
    "tpu.trace_start"() <{level = 10 : i32, message = "bni,bmi->bnm"}> : () -> ()
    %cst_7 = arith.constant dense<0.000000e+00> : vector<2x8x8xf32>
    %13 = tpu.matmul %12, %12, %cst_7 {dimension_numbers = #tpu.dot_dimension_numbers<[2], [2], [1], [1], [0, 0, 0, 1, 1, 1], [0], [0]>} : vector<2x8x3xf32>, vector<2x8x3xf32>, vector<2x8x8xf32> -> vector<2x8x8xf32>
    "tpu.trace_stop"() : () -> ()
    %14 = arith.mulf %12, %12 : vector<2x8x3xf32>
    %cst_8 = arith.constant dense<0.000000e+00> : vector<2x8xf32>
    %15 = vector.multi_reduction <add>, %14, %cst_8 [2] : vector<2x8x3xf32> to vector<2x8xf32>
    %16 = vector.shape_cast %15 : vector<2x8xf32> to vector<2x8x1xf32>
    %17 = vector.shape_cast %15 : vector<2x8xf32> to vector<2x1x8xf32>
    %18 = vector.broadcast %16 : vector<2x8x1xf32> to vector<2x8x8xf32>
    %19 = vector.broadcast %17 : vector<2x1x8xf32> to vector<2x8x8xf32>
    %20 = arith.addf %18, %19 : vector<2x8x8xf32>
    %cst_9 = arith.constant 2.000000e+00 : f32
    %21 = vector.broadcast %cst_9 : f32 to vector<2x8x8xf32>
    %22 = arith.mulf %21, %13 : vector<2x8x8xf32>
    %23 = arith.subf %20, %22 : vector<2x8x8xf32>
    %cst_10 = arith.constant 0.000000e+00 : f32
    %24 = vector.broadcast %cst_10 : f32 to vector<2x8x8xf32>
    %25 = arith.maximumf %23, %24 : vector<2x8x8xf32>
    %cst_11 = arith.constant 0.000000e+00 : f32
    %26 = vector.broadcast %cst_11 : f32 to vector<2x8x8xf32>
    %27 = arith.subf %26, %25 : vector<2x8x8xf32>
    %28 = math.exp %27 : vector<2x8x8xf32>
    %c0_12 = arith.constant 0 : index
    %c0_13 = arith.constant 0 : index
    %c0_14 = arith.constant 0 : index
    %29 = vector.load %arg2[%c0_12, %c0_13, %c0_14] : memref<2x8x8xi8, #tpu.memory_space<vmem>>, vector<2x8x8xi8>
    %30 = arith.sitofp %29 : vector<2x8x8xi8> to vector<2x8x8xf32>
    %31 = arith.mulf %28, %30 : vector<2x8x8xf32>
    %32 = vector.shape_cast %9 : vector<16x32xf32> to vector<2x8x32xf32>
    "tpu.trace_start"() <{level = 10 : i32, message = "bnm,bmd->bnd"}> : () -> ()
    %cst_15 = arith.constant dense<0.000000e+00> : vector<2x8x32xf32>
    %33 = tpu.matmul %31, %32, %cst_15 {dimension_numbers = #tpu.dot_dimension_numbers<[2], [1], [1], [2], [0, 0, 0, 1, 1, 2], [0], [0]>} : vector<2x8x8xf32>, vector<2x8x32xf32>, vector<2x8x32xf32> -> vector<2x8x32xf32>
    "tpu.trace_stop"() : () -> ()
    %34 = vector.shape_cast %33 : vector<2x8x32xf32> to vector<16x32xf32>
    %c0_16 = arith.constant 0 : index
    %c0_17 = arith.constant 0 : index
    %35 = vector.load %arg5[%c0_16, %c0_17] : memref<32x96xf32, #tpu.memory_space<vmem>>, vector<32x96xf32>
    %cst_18 = arith.constant dense<0.000000e+00> : vector<16x96xf32>
    %36 = tpu.matmul %34, %35, %cst_18 {dimension_numbers = #tpu.dot_dimension_numbers<[1], [0], [0], [1], [0, 0, 1, 1], [], []>} : vector<16x32xf32>, vector<32x96xf32>, vector<16x96xf32> -> vector<16x96xf32>
    %c0_19 = arith.constant 0 : index
    %c0_20 = arith.constant 0 : index
    %37 = vector.load %arg6[%c0_19, %c0_20] : memref<1x96xf32, #tpu.memory_space<vmem>>, vector<1x96xf32>
    %38 = vector.broadcast %37 : vector<1x96xf32> to vector<16x96xf32>
    %39 = arith.addf %36, %38 : vector<16x96xf32>
    %40 = vector.extract_strided_slice %39 {offsets = [0, 0], sizes = [16, 32], strides = [1, 1]} : vector<16x96xf32> to vector<16x32xf32>
    %41 = vector.extract_strided_slice %10 {offsets = [0, 0], sizes = [16, 32], strides = [1, 1]} : vector<16x96xf32> to vector<16x32xf32>
    %42 = arith.addf %40, %41 : vector<16x32xf32>
    %43 = arith.negf %42 : vector<16x32xf32>
    %44 = math.exp %43 : vector<16x32xf32>
    %cst_21 = arith.constant 1.000000e+00 : f32
    %45 = vector.broadcast %cst_21 : f32 to vector<16x32xf32>
    %46 = arith.addf %45, %44 : vector<16x32xf32>
    %47 = arith.divf %45, %46 : vector<16x32xf32>
    %48 = vector.extract_strided_slice %39 {offsets = [0, 32], sizes = [16, 32], strides = [1, 1]} : vector<16x96xf32> to vector<16x32xf32>
    %49 = vector.extract_strided_slice %10 {offsets = [0, 32], sizes = [16, 32], strides = [1, 1]} : vector<16x96xf32> to vector<16x32xf32>
    %50 = arith.addf %48, %49 : vector<16x32xf32>
    %51 = arith.negf %50 : vector<16x32xf32>
    %52 = math.exp %51 : vector<16x32xf32>
    %cst_22 = arith.constant 1.000000e+00 : f32
    %53 = vector.broadcast %cst_22 : f32 to vector<16x32xf32>
    %54 = arith.addf %53, %52 : vector<16x32xf32>
    %55 = arith.divf %53, %54 : vector<16x32xf32>
    %56 = vector.extract_strided_slice %39 {offsets = [0, 64], sizes = [16, 32], strides = [1, 1]} : vector<16x96xf32> to vector<16x32xf32>
    %57 = vector.extract_strided_slice %10 {offsets = [0, 64], sizes = [16, 32], strides = [1, 1]} : vector<16x96xf32> to vector<16x32xf32>
    %58 = arith.mulf %47, %57 : vector<16x32xf32>
    %59 = arith.addf %56, %58 : vector<16x32xf32>
    %60 = math.tanh %59 : vector<16x32xf32>
    %cst_23 = arith.constant 1.000000e+00 : f32
    %61 = vector.broadcast %cst_23 : f32 to vector<16x32xf32>
    %62 = arith.subf %61, %55 : vector<16x32xf32>
    %63 = arith.mulf %62, %60 : vector<16x32xf32>
    %64 = arith.mulf %55, %1 : vector<16x32xf32>
    %65 = arith.addf %63, %64 : vector<16x32xf32>
    %66 = vector.shape_cast %65 : vector<16x32xf32> to vector<2x8x32xf32>
    %c0_24 = arith.constant 0 : index
    %c0_25 = arith.constant 0 : index
    %c0_26 = arith.constant 0 : index
    %67 = vector.load %arg7[%c0_24, %c0_25, %c0_26] : memref<2x8x32xf32, #tpu.memory_space<vmem>>, vector<2x8x32xf32>
    tpu.vector_store %arg7[%c0_24, %c0_25, %c0_26], %66 {strides = array<i32>} : memref<2x8x32xf32, #tpu.memory_space<vmem>>, vector<2x8x32xf32>,
    return
  }
  func.func @transform_0(%arg0: i32) -> (i32, i32, i32) {
    %c0_i32 = arith.constant 0 : i32
    %c0_i32_0 = arith.constant 0 : i32
    %c0_i32_1 = arith.constant 0 : i32
    return %arg0, %c0_i32, %c0_i32_0 : i32, i32, i32
  }
  func.func @transform_1(%arg0: i32) -> (i32, i32, i32) {
    %c0_i32 = arith.constant 0 : i32
    %c0_i32_0 = arith.constant 0 : i32
    %c0_i32_1 = arith.constant 0 : i32
    return %arg0, %c0_i32, %c0_i32_0 : i32, i32, i32
  }
  func.func @transform_2(%arg0: i32) -> (i32, i32) {
    %c0_i32 = arith.constant 0 : i32
    %c0_i32_0 = arith.constant 0 : i32
    %c0_i32_1 = arith.constant 0 : i32
    return %c0_i32, %c0_i32_0 : i32, i32
  }
  func.func @transform_3(%arg0: i32) -> (i32, i32) {
    %c0_i32 = arith.constant 0 : i32
    %c0_i32_0 = arith.constant 0 : i32
    %c0_i32_1 = arith.constant 0 : i32
    return %c0_i32, %c0_i32_0 : i32, i32
  }
  func.func @transform_4(%arg0: i32) -> (i32, i32) {
    %c0_i32 = arith.constant 0 : i32
    %c0_i32_0 = arith.constant 0 : i32
    %c0_i32_1 = arith.constant 0 : i32
    return %c0_i32, %c0_i32_0 : i32, i32
  }
  func.func @transform_5(%arg0: i32) -> (i32, i32) {
    %c0_i32 = arith.constant 0 : i32
    %c0_i32_0 = arith.constant 0 : i32
    %c0_i32_1 = arith.constant 0 : i32
    return %c0_i32, %c0_i32_0 : i32, i32
  }
  func.func @transform_6(%arg0: i32) -> (i32, i32, i32) {
    %c0_i32 = arith.constant 0 : i32
    %c0_i32_0 = arith.constant 0 : i32
    %c0_i32_1 = arith.constant 0 : i32
    return %arg0, %c0_i32, %c0_i32_0 : i32, i32, i32
  }
}

</mosaic_0001>

<llo_original>
// kernel: tpu_custom_call.1
$region0: #{tpu_custom_call.1}
  #allocation0 [shape = 'u32[]', space=smem, size = 0x4, offset = 0x4, fixed_abs, tag = 'smem constant byte address 0x4 - core index']
  #allocation1 [shape = 'u32[72,128]{1,0:T(1,128)}', space=vmem, size = 0x9000, scoped, tag = 'internal scratch']
  %s0 = inlined_call_operand.hbm [shape: f32[2,8,32], index: 0, kind: input, shape index: {}]
  %s1 = inlined_call_operand.hbm [shape: s8[2,8,8], index: 1, kind: input, shape index: {}]
  %s2 = inlined_call_operand.hbm [shape: f32[32,131], index: 2, kind: input, shape index: {}]
  %s3 = inlined_call_operand.vmem [shape: f32[1,131], index: 3, kind: input, shape index: {}]
  %s4 = inlined_call_operand.hbm [shape: f32[32,96], index: 4, kind: input, shape index: {}]
  %s5 = inlined_call_operand.vmem [shape: f32[1,96], index: 5, kind: input, shape index: {}]
  %s6 = inlined_call_operand.hbm [shape: f32[2,8,32], index: 6, kind: output, shape index: {}]
  %s7 = sld [smem:[#allocation0]]
  $region50: #{tpu_custom_call.1} parent=0
    _
  %s9 = ssub.s32 1, %s7
  %s10 = scalar_select 0, %s9, %s7
  $region1: #{tpu_custom_call.1} parent=0
    #allocation2 [shape = 'u8[8192]{0}', space=vmem, size = 0x2000, scoped, tag = 'input window, operand 0, single buffered']
    #allocation3 [shape = 's32[1]{0}', space=sflag, size = 0x4, scoped, tag = 'scoped memory for tpu_custom_call.1']
    #allocation4 [shape = 's32[1]{0}', space=sflag, size = 0x4, scoped, tag = 'scoped memory for tpu_custom_call.1']
    #allocation5 [shape = 'u8[2048]{0}', space=vmem, size = 0x800, scoped, tag = 'input window, operand 1, single buffered']
    #allocation6 [shape = 's32[1]{0}', space=sflag, size = 0x4, scoped, tag = 'scoped memory for tpu_custom_call.1']
    #allocation7 [shape = 'u8[32768]{0}', space=vmem, size = 0x8000, scoped, tag = 'input window, operand 2, single buffered']
    #allocation8 [shape = 'u8[16384]{0}', space=vmem, size = 0x4000, scoped, tag = 'input window, operand 4, single buffered']
    #allocation9 [shape = 's32[1]{0}', space=sflag, size = 0x4, scoped, tag = 'scoped memory for tpu_custom_call.1']
    #allocation10 [shape = 'u8[8192]{0}', space=vmem, size = 0x2000, scoped, tag = 'output window, operand 0, single buffered']
    %11 = vsyncpa [#allocation3], 0
    %12 = vsyncpa [#allocation6], 0
    %13 = vsyncpa [#allocation9], 0
    %14 = vsyncpa [#allocation4], 0
    // Predicated region
    $region2: #{tpu_custom_call.1} parent=1 // pred_check
      _
    $region3: #{tpu_custom_call.1} parent=1 // pred_check_branch
      %16 = sbr.rel (0) target = $region5
    $region4: #{tpu_custom_call.1} parent=1 // pred_region
      %18 = vsyncadd [#allocation3], 0
      %s19 = sshll.u32 %s0, 4
      %s20 = int_to_ptr.hbm [resolvable:$true] %s19
      %s21 = sshll.u32 [#allocation2], 4
      %s22 = int_to_ptr.vmem [resolvable:$true] %s21
      %27 = dma.hbm_to_vmem [thread:$0]  %s20, 256, %s22, [#allocation3], 128, 128, 8
    $region5: #{tpu_custom_call.1} parent=1 // pred_fallthru
      _
    // Predicated region
    $region6: #{tpu_custom_call.1} parent=1 // pred_check
      _
    $region7: #{tpu_custom_call.1} parent=1 // pred_check_branch
      %29 = sbr.rel (0) target = $region9
    $region8: #{tpu_custom_call.1} parent=1 // pred_region
      %31 = vsyncadd [#allocation6], 0
      %s32 = sshll.u32 %s1, 4
      %s33 = int_to_ptr.hbm [resolvable:$true] %s32
      %s34 = sshll.u32 [#allocation5], 4
      %s35 = int_to_ptr.vmem [resolvable:$true] %s34
      %40 = dma.hbm_to_vmem [thread:$0]  %s33, 64, %s35, [#allocation6], 32, 32, 2
    $region9: #{tpu_custom_call.1} parent=1 // pred_fallthru
      _
    // Predicated region
    $region10: #{tpu_custom_call.1} parent=1 // pred_check
      _
    $region11: #{tpu_custom_call.1} parent=1 // pred_check_branch
      %42 = sbr.rel (0) target = $region13
    $region12: #{tpu_custom_call.1} parent=1 // pred_region
      %44 = vsyncadd [#allocation6], 0
      %s45 = sshll.u32 %s2, 4
      %s46 = int_to_ptr.hbm [resolvable:$true] %s45
      %s47 = sshll.u32 [#allocation7], 4
      %s48 = int_to_ptr.vmem [resolvable:$true] %s47
      %53 = dma.hbm_to_vmem [thread:$0]  %s46, 1024, %s48, [#allocation6], 256, 256, 16
    $region13: #{tpu_custom_call.1} parent=1 // pred_fallthru
      _
    // Predicated region
    $region14: #{tpu_custom_call.1} parent=1 // pred_check
      _
    $region15: #{tpu_custom_call.1} parent=1 // pred_check_branch
      %55 = sbr.rel (0) target = $region17
    $region16: #{tpu_custom_call.1} parent=1 // pred_region
      _
    $region17: #{tpu_custom_call.1} parent=1 // pred_fallthru
      _
    // Predicated region
    $region18: #{tpu_custom_call.1} parent=1 // pred_check
      _
    $region19: #{tpu_custom_call.1} parent=1 // pred_check_branch
      %57 = sbr.rel (0) target = $region21
    $region20: #{tpu_custom_call.1} parent=1 // pred_region
      %59 = vsyncadd [#allocation9], 0
      %s60 = sshll.u32 %s4, 4
      %s61 = int_to_ptr.hbm [resolvable:$true] %s60
      %s62 = sshll.u32 [#allocation8], 4
      %s63 = int_to_ptr.vmem [resolvable:$true] %s62
      %68 = dma.hbm_to_vmem [thread:$0]  %s61, 512, %s63, [#allocation9], 128, 128, 8
    $region21: #{tpu_custom_call.1} parent=1 // pred_fallthru
      _
    // Predicated region
    $region22: #{tpu_custom_call.1} parent=1 // pred_check
      _
    $region23: #{tpu_custom_call.1} parent=1 // pred_check_branch
      %70 = sbr.rel (0) target = $region25
    $region24: #{tpu_custom_call.1} parent=1 // pred_region
      _
    $region25: #{tpu_custom_call.1} parent=1 // pred_fallthru
      _
    // Predicated region
    $region26: #{tpu_custom_call.1} parent=1 // pred_check
      _
    $region27: #{tpu_custom_call.1} parent=1 // pred_check_branch
      %72 = sbr.rel (0) target = $region29
    $region28: #{tpu_custom_call.1} parent=1 // pred_region
      %74 = dma.done [#allocation3], 256
    $region29: #{tpu_custom_call.1} parent=1 // pred_fallthru
      _
    // Predicated region
    $region30: #{tpu_custom_call.1} parent=1 // pred_check
      _
    $region31: #{tpu_custom_call.1} parent=1 // pred_check_branch
      %76 = sbr.rel (0) target = $region33
    $region32: #{tpu_custom_call.1} parent=1 // pred_region
      %78 = dma.done [#allocation6], 64
    $region33: #{tpu_custom_call.1} parent=1 // pred_fallthru
      _
    // Predicated region
    $region34: #{tpu_custom_call.1} parent=1 // pred_check
      _
    $region35: #{tpu_custom_call.1} parent=1 // pred_check_branch
      %80 = sbr.rel (0) target = $region37
    $region36: #{tpu_custom_call.1} parent=1 // pred_region
      %82 = dma.done [#allocation6], 1024
    $region37: #{tpu_custom_call.1} parent=1 // pred_fallthru
      _
    // Predicated region
    $region38: #{tpu_custom_call.1} parent=1 // pred_check
      _
    $region39: #{tpu_custom_call.1} parent=1 // pred_check_branch
      %84 = sbr.rel (0) target = $region41
    $region40: #{tpu_custom_call.1} parent=1 // pred_region
      %86 = dma.done [#allocation9], 512
    $region41: #{tpu_custom_call.1} parent=1 // pred_fallthru
      _
    %v87 = vld [vmem:[#allocation2] sm:$0xff]
    %v88 = vld [vmem:[#allocation2 + $0x8] sm:$0xff]
    %v89 = vld [vmem:[#allocation7] sm:$0xff]
    %v90 = vld [vmem:[#allocation7 + $0x8] sm:$0xff]
    %v91 = vld [vmem:[#allocation7 + $0x10] sm:$0xff]
    %v92 = vld [vmem:[#allocation7 + $0x18] sm:$0xff]
    %v93 = vld [vmem:[#allocation7 + $0x20] sm:$0xff]
    %v94 = vld [vmem:[#allocation7 + $0x28] sm:$0xff]
    %v95 = vld [vmem:[#allocation7 + $0x30] sm:$0xff]
    %v96 = vld [vmem:[#allocation7 + $0x38] sm:$0xff]
    %v97 = vld [vmem:[%s3] sm:$0x3]
    %v99 = vperm.slane %v97, 0
    %v100 = vperm.slane %v97, 1
    %vm103 = vcmask 261120
    %v105 = vsel %vm103, %v87, 0
    %v108 = vsel %vm103, %v88, 0
    %110 = vmatpush.msra.mxu0 0.0
    %111 = vmatpush.msra.mxu0 0.0
    %112 = vmatpush.msra.mxu0 0.0
    %113 = vmatpush.msra.mxu0 0.0
    %114 = vmatpush.msra.mxu0 0.0
    %115 = vmatpush.msra.mxu0 0.0
    %116 = vmatpush.msra.mxu0 0.0
    %117 = vmatpush.msra.mxu0 0.0
    %118 = vmatpush.msra.mxu0 0.0
    %119 = vmatpush.msra.mxu0 0.0
    %120 = vmatpush.msra.mxu0 0.0
    %121 = vmatpush.msra.mxu0 0.0
    %122 = vmatpush.msra.mxu0 %v95
    %123 = vmatpush.msra.mxu0 %v93
    %124 = vmatpush.msra.mxu0 %v91
    %125 = vmatpush.msra.mxu0 %v89
    %126 = vmatmul.f32.gmra.mxu0 %v105
    %v127 = vpop.f32.mrf.mxu0
    %v128 = vadd.f32 %v99, %v127
    %129 = vmatmul.f32.gmra.mxu0 %v108
    %v130 = vpop.f32.mrf.mxu0
    %v131 = vadd.f32 %v99, %v130
    %132 = vdwg.mxu0
    %133 = vmatpush.msra.mxu0 0.0
    %134 = vmatpush.msra.mxu0 0.0
    %135 = vmatpush.msra.mxu0 0.0
    %136 = vmatpush.msra.mxu0 0.0
    %137 = vmatpush.msra.mxu0 0.0
    %138 = vmatpush.msra.mxu0 0.0
    %139 = vmatpush.msra.mxu0 0.0
    %140 = vmatpush.msra.mxu0 0.0
    %141 = vmatpush.msra.mxu0 0.0
    %142 = vmatpush.msra.mxu0 0.0
    %143 = vmatpush.msra.mxu0 0.0
    %144 = vmatpush.msra.mxu0 0.0
    %145 = vmatpush.msra.mxu0 %v96
    %146 = vmatpush.msra.mxu0 %v94
    %147 = vmatpush.msra.mxu0 %v92
    %148 = vmatpush.msra.mxu0 %v90
    %149 = vmatmul.f32.gmra.mxu0 %v105
    %v150 = vpop.f32.mrf.mxu0
    %v151 = vadd.f32 %v100, %v150
    %152 = vmatmul.f32.gmra.mxu0 %v108
    %v153 = vpop.f32.mrf.mxu0
    %v154 = vadd.f32 %v100, %v153
    %155 = vdwg.mxu0
    %v156 = vmax.f32 %v128, 0.0
    %v157 = vmax.f32 %v131, 0.0
    %vm158 = vcmask 23552
    %v160 = vsel %vm158, %v151, 0
    %162 = vmatpush.xpose.msra.mxu0 0.0
    %163 = vmatpush.xpose.msra.mxu0 0.0
    %164 = vmatpush.xpose.msra.mxu0 0.0
    %165 = vmatpush.xpose.msra.mxu0 0.0
    %166 = vmatpush.xpose.msra.mxu0 0.0
    %167 = vmatpush.xpose.msra.mxu0 0.0
    %168 = vmatpush.xpose.msra.mxu0 0.0
    %169 = vmatpush.xpose.msra.mxu0 0.0
    %170 = vmatpush.xpose.msra.mxu0 0.0
    %171 = vmatpush.xpose.msra.mxu0 0.0
    %172 = vmatpush.xpose.msra.mxu0 0.0
    %173 = vmatpush.xpose.msra.mxu0 0.0
    %174 = vmatpush.xpose.msra.mxu0 0.0
    %175 = vmatpush.xpose.msra.mxu0 0.0
    %176 = vmatpush.xpose.msra.mxu0 0.0
    %177 = vmatpush.xpose.msra.mxu0 %v160
    %178 = vmatmul.f32.gmra.mxu0 %v160
    %v179 = vpop.f32.mrf.mxu0
    %v180 = vadd.f32 0.0, %v179
    %181 = vdwg.mxu0
    %v183 = vsel %vm158, %v154, 0
    %185 = vmatpush.xpose.msra.mxu0 0.0
    %186 = vmatpush.xpose.msra.mxu0 0.0
    %187 = vmatpush.xpose.msra.mxu0 0.0
    %188 = vmatpush.xpose.msra.mxu0 0.0
    %189 = vmatpush.xpose.msra.mxu0 0.0
    %190 = vmatpush.xpose.msra.mxu0 0.0
    %191 = vmatpush.xpose.msra.mxu0 0.0
    %192 = vmatpush.xpose.msra.mxu0 0.0
    %193 = vmatpush.xpose.msra.mxu0 0.0
    %194 = vmatpush.xpose.msra.mxu0 0.0
    %195 = vmatpush.xpose.msra.mxu0 0.0
    %196 = vmatpush.xpose.msra.mxu0 0.0
    %197 = vmatpush.xpose.msra.mxu0 0.0
    %198 = vmatpush.xpose.msra.mxu0 0.0
    %199 = vmatpush.xpose.msra.mxu0 0.0
    %200 = vmatpush.xpose.msra.mxu0 %v183
    %201 = vmatmul.f32.gmra.mxu0 %v183
    %v202 = vpop.f32.mrf.mxu0
    %v203 = vadd.f32 0.0, %v202
    %204 = vdwg.mxu0
    %v205 = vmul.f32 %v151, %v151
    %v206 = vmul.f32 %v154, %v154
    %v207 = vsel %vm158, %v205, 0.0
    %208 = vadd.xlane.f32.xlu0 %v207
    %v209 = vpop.xlane.xlu0 %208
    %v210 = vsel %vm158, %v206, 0.0
    %211 = vadd.xlane.f32.xlu0 %v210
    %v212 = vpop.xlane.xlu0 %211
    %v215 = vlaneseq
    %v216 = vand.u32 %v215, 127
    %v217 = vperm.slane %v209, %v216
    %v218 = vperm.slane %v212, %v216
    %vm219 = vcmask 1042434
    %v220 = vsel %vm219, %v217, %v217
    %vm221 = vcmask 1043459
    %v222 = vsel %vm221, %v217, %v220
    %vm223 = vcmask 1044484
    %v224 = vsel %vm223, %v217, %v222
    %vm225 = vcmask 1045509
    %v226 = vsel %vm225, %v217, %v224
    %vm227 = vcmask 1046534
    %v228 = vsel %vm227, %v217, %v226
    %vm229 = vcmask 1047559
    %v230 = vsel %vm229, %v217, %v228
    %v231 = vsel %vm219, %v218, %v218
    %v232 = vsel %vm221, %v218, %v231
    %v233 = vsel %vm223, %v218, %v232
    %v234 = vsel %vm225, %v218, %v233
    %v235 = vsel %vm227, %v218, %v234
    %v236 = vsel %vm229, %v218, %v235
    %v239 = vadd.f32 %v209, %v230
    %v240 = vadd.f32 %v212, %v236
    %v241 = vmul.f32 %v180, 2.0
    %v242 = vmul.f32 %v203, 2.0
    %v243 = vsub.f32 %v239, %v241
    %v244 = vsub.f32 %v240, %v242
    %v245 = vmax.f32 %v243, 0.0
    %v246 = vmax.f32 %v244, 0.0
    %v247 = vsub.f32 0.0, %v245
    %v248 = vsub.f32 0.0, %v246
    %v249 = vmul.f32 %v247, 1.442695
    %v250 = vpow.pop %v249
    %v251 = vmul.f32 %v248, 1.442695
    %v252 = vpow.pop %v251
    %v253 = vld [vmem:[#allocation5] sm:$0x3]
    %v254 = vld [vmem:[#allocation5 + $0x2] sm:$0x3]
    %v255 = vunpack.c.0.s8 %v253
    %v256 = vunpack.c.0.s8 %v254
    %v257 = vcvt.s32.f32 %v255
    %v258 = vcvt.s32.f32 %v256
    %v259 = vmul.f32 %v250, %v257
    %v260 = vmul.f32 %v252, %v258
    %vm261 = vcmask 64512
    %v263 = vsel %vm261, %v259, 0
    %265 = vmatpush.msra.mxu0 0.0
    %266 = vmatpush.msra.mxu0 0.0
    %267 = vmatpush.msra.mxu0 0.0
    %268 = vmatpush.msra.mxu0 0.0
    %269 = vmatpush.msra.mxu0 0.0
    %270 = vmatpush.msra.mxu0 0.0
    %271 = vmatpush.msra.mxu0 0.0
    %272 = vmatpush.msra.mxu0 0.0
    %273 = vmatpush.msra.mxu0 0.0
    %274 = vmatpush.msra.mxu0 0.0
    %275 = vmatpush.msra.mxu0 0.0
    %276 = vmatpush.msra.mxu0 0.0
    %277 = vmatpush.msra.mxu0 0.0
    %278 = vmatpush.msra.mxu0 0.0
    %279 = vmatpush.msra.mxu0 0.0
    %280 = vmatpush.msra.mxu0 %v156
    %281 = vmatmul.f32.gmra.mxu0 %v263
    %v282 = vpop.f32.mrf.mxu0
    %v283 = vadd.f32 0.0, %v282
    %284 = vdwg.mxu0
    %v286 = vsel %vm261, %v260, 0
    %288 = vmatpush.msra.mxu0 0.0
    %289 = vmatpush.msra.mxu0 0.0
    %290 = vmatpush.msra.mxu0 0.0
    %291 = vmatpush.msra.mxu0 0.0
    %292 = vmatpush.msra.mxu0 0.0
    %293 = vmatpush.msra.mxu0 0.0
    %294 = vmatpush.msra.mxu0 0.0
    %295 = vmatpush.msra.mxu0 0.0
    %296 = vmatpush.msra.mxu0 0.0
    %297 = vmatpush.msra.mxu0 0.0
    %298 = vmatpush.msra.mxu0 0.0
    %299 = vmatpush.msra.mxu0 0.0
    %300 = vmatpush.msra.mxu0 0.0
    %301 = vmatpush.msra.mxu0 0.0
    %302 = vmatpush.msra.mxu0 0.0
    %303 = vmatpush.msra.mxu0 %v157
    %304 = vmatmul.f32.gmra.mxu0 %v286
    %v305 = vpop.f32.mrf.mxu0
    %v306 = vadd.f32 0.0, %v305
    %307 = vdwg.mxu0
    %v308 = vld [vmem:[#allocation8] sm:$0xff]
    %v309 = vld [vmem:[#allocation8 + $0x8] sm:$0xff]
    %v310 = vld [vmem:[#allocation8 + $0x10] sm:$0xff]
    %v311 = vld [vmem:[#allocation8 + $0x18] sm:$0xff]
    %v312 = vld [vmem:[%s5] sm:$0x1]
    %v314 = vperm.slane %v312, 0
    %v317 = vsel %vm103, %v283, 0
    %v320 = vsel %vm103, %v306, 0
    %322 = vmatpush.msra.mxu0 0.0
    %323 = vmatpush.msra.mxu0 0.0
    %324 = vmatpush.msra.mxu0 0.0
    %325 = vmatpush.msra.mxu0 0.0
    %326 = vmatpush.msra.mxu0 0.0
    %327 = vmatpush.msra.mxu0 0.0
    %328 = vmatpush.msra.mxu0 0.0
    %329 = vmatpush.msra.mxu0 0.0
    %330 = vmatpush.msra.mxu0 0.0
    %331 = vmatpush.msra.mxu0 0.0
    %332 = vmatpush.msra.mxu0 0.0
    %333 = vmatpush.msra.mxu0 0.0
    %334 = vmatpush.msra.mxu0 %v311
    %335 = vmatpush.msra.mxu0 %v310
    %336 = vmatpush.msra.mxu0 %v309
    %337 = vmatpush.msra.mxu0 %v308
    %338 = vmatmul.f32.gmra.mxu0 %v317
    %v339 = vpop.f32.mrf.mxu0
    %v340 = vadd.f32 %v314, %v339
    %341 = vmatmul.f32.gmra.mxu0 %v320
    %v342 = vpop.f32.mrf.mxu0
    %v343 = vadd.f32 %v314, %v342
    %344 = vdwg.mxu0
    %347 = vrot.lane.b32.xlu0 %v128, 96
    %v348 = vpop.permute.xlu0 %347
    %349 = vrot.lane.b32.xlu0 %v131, 96
    %v350 = vpop.permute.xlu0 %349
    %v353 = vadd.f32 %v340, %v348
    %v354 = vadd.f32 %v343, %v350
    %v355 = vxor.u32 %v353, 2147483648
    %v356 = vxor.u32 %v354, 2147483648
    %v357 = vmul.f32 %v355, 1.442695
    %v358 = vpow.pop %v357
    %v359 = vmul.f32 %v356, 1.442695
    %v360 = vpow.pop %v359
    %v361 = vadd.f32 %v358, 1.0
    %v362 = vadd.f32 %v360, 1.0
    %v363 = vrcp.pop %v361
    %v364 = vmul.f32 %v361, %v363
    %v365 = vsub.f32 1.0, %v364
    %v366 = vmul.f32 %v363, %v365
    %v367 = vadd.f32 %v363, %v366
    %vm368 = vweird.f32 %v361
    %vm369 = vweird.f32 %v363
    %vm370 = vmor %vm368, %vm369
    %v371 = vsel %vm370, %v363, %v367
    %v372 = vand.u32 2147483647, %v361
    %vm373 = vcmp.eq.f32.partialorder %v372, 8.507059e+37
    %v374 = vand.u32 %v361, 2147483648
    %v375 = vor.u32 1.1754944e-38, %v374
    %v376 = vsel %vm373, %v375, %v371
    %v377 = vmul.f32 1.0, %v376
    %v378 = vrcp.pop %v362
    %v379 = vmul.f32 %v362, %v378
    %v380 = vsub.f32 1.0, %v379
    %v381 = vmul.f32 %v378, %v380
    %v382 = vadd.f32 %v378, %v381
    %vm383 = vweird.f32 %v362
    %vm384 = vweird.f32 %v378
    %vm385 = vmor %vm383, %vm384
    %v386 = vsel %vm385, %v378, %v382
    %v387 = vand.u32 2147483647, %v362
    %vm388 = vcmp.eq.f32.partialorder %v387, 8.507059e+37
    %v389 = vand.u32 %v362, 2147483648
    %v390 = vor.u32 1.1754944e-38, %v389
    %v391 = vsel %vm388, %v390, %v386
    %v392 = vmul.f32 1.0, %v391
    %393 = vrot.lane.b32.xlu0 %v128, 32
    %v394 = vpop.permute.xlu0 %393
    %395 = vrot.lane.b32.xlu0 %v131, 32
    %v396 = vpop.permute.xlu0 %395
    %v399 = vmul.f32 %v377, %v394
    %v400 = vmul.f32 %v392, %v396
    %403 = vrot.lane.b32.xlu0 %v399, 64
    %v404 = vpop.permute.xlu0 %403
    %405 = vrot.lane.b32.xlu0 %v400, 64
    %v406 = vpop.permute.xlu0 %405
    %v409 = vadd.f32 %v340, %v404
    %v410 = vadd.f32 %v343, %v406
    %v411 = vtanh.pop %v409
    %v412 = vtanh.pop %v410
    %v413 = vsub.f32 1.0, %v377
    %v414 = vsub.f32 1.0, %v392
    %417 = vrot.lane.b32.xlu0 %v411, 96
    %v418 = vpop.permute.xlu0 %417
    %419 = vrot.lane.b32.xlu0 %v412, 96
    %v420 = vpop.permute.xlu0 %419
    %v423 = vmul.f32 %v413, %v418
    %v424 = vmul.f32 %v414, %v420
    %425 = vrot.lane.b32.xlu0 %v87, 32
    %v426 = vpop.permute.xlu0 %425
    %427 = vrot.lane.b32.xlu0 %v88, 32
    %v428 = vpop.permute.xlu0 %427
    %v431 = vmul.f32 %v377, %v426
    %v432 = vmul.f32 %v392, %v428
    %v433 = vadd.f32 %v423, %v431
    %v434 = vadd.f32 %v424, %v432
    %437 = vrot.lane.b32.xlu0 %v433, 96
    %v438 = vpop.permute.xlu0 %437
    %439 = vrot.lane.b32.xlu0 %v434, 96
    %v440 = vpop.permute.xlu0 %439
    %443 = vst.msk [vmem:[#allocation10] sm:$0xff] %vm103, %v438
    %444 = vst.msk [vmem:[#allocation10 + $0x8] sm:$0xff] %vm103, %v440
    // Predicated region
    $region42: #{tpu_custom_call.1} parent=1 // pred_check
      _
    $region43: #{tpu_custom_call.1} parent=1 // pred_check_branch
      %446 = sbr.rel (0) target = $region45
    $region44: #{tpu_custom_call.1} parent=1 // pred_region
      %448 = vsyncadd [#allocation4], 0
      %s449 = sshll.u32 [#allocation10], 4
      %s450 = int_to_ptr.vmem [resolvable:$true] %s449
      %s451 = sshll.u32 %s6, 4
      %s452 = int_to_ptr.hbm [resolvable:$true] %s451
      %457 = dma.vmem_to_hbm [thread:$0]  %s450, 256, %s452, [#allocation4], 128, 128, 8
    $region45: #{tpu_custom_call.1} parent=1 // pred_fallthru
      _
    // Predicated region
    $region46: #{tpu_custom_call.1} parent=1 // pred_check
      _
    $region47: #{tpu_custom_call.1} parent=1 // pred_check_branch
      %459 = sbr.rel (0) target = $region49
    $region48: #{tpu_custom_call.1} parent=1 // pred_region
      %461 = dma.done [#allocation4], 256
    $region49: #{tpu_custom_call.1} parent=1 // pred_fallthru
      _
    %462 = vsyncpa [#allocation3], 1
    %463 = vsyncpa [#allocation6], 1
    %464 = vsyncpa [#allocation9], 1
    %465 = vsyncpa [#allocation4], 1

</llo_original>
